<compile_context>
chip_gen: v6e
topology: v6e:2x2x1
jax: 0.10.0
libtpu: 0.0.40
codegen_flags: <defaults>
</compile_context>

<pallas_src>
import functools

import jax
import jax.numpy as jnp
from jax.experimental import pallas as pl
from jax.experimental.pallas import tpu as pltpu


def _round_up(x, m):
    return (x + m - 1) // m * m


def llama_ffn_hidden_dim(dim: int, hidden_dim: int, multiple_of: int,
                         ffn_dim_multiplier=None) -> int:
    hidden_dim = int(2 * hidden_dim / 3)
    if ffn_dim_multiplier is not None:
        hidden_dim = int(ffn_dim_multiplier * hidden_dim)
    return multiple_of * ((hidden_dim + multiple_of - 1) // multiple_of)


def _vmem_capacity_bytes():
    try:
        return int(pltpu.get_tpu_info().vmem_capacity_bytes)
    except Exception:
        return 128 * 1024 * 1024  # v5e/v6e default; v7x is 64 MiB/TC


def _vmem_limit_bytes():
    return int(_vmem_capacity_bytes() * 3 // 4)


def prepare_ffn_weights(w1, w2, w3, *, tn=None, compute_dtype=jnp.bfloat16):
    """One-time weight preparation (do at weight-load time, NOT per call).

    w1, w3: (hidden, dim); w2: (dim, hidden)  (nn.Linear layouts).
    Returns (w13, w2t, tn):
      w13: (n_tiles, dim, 2*tn) -- slab j holds [w1^T tile j | w3^T tile j],
           contiguous in HBM so the per-tile DMA is a single dense slab and
           one MXU matmul yields both gate and up projections.
      w2t: (hidden_pad, dim) -- w2 transposed (kernel does plain x @ W).
    `hidden` is zero-padded to a multiple of tn (mathematically a no-op).
    """
    hidden, dim = w1.shape
    if tn is None:
        # v7x (64 MiB VMEM/TC) -> 512; v5e/v6e (128 MiB) -> 1024.
        tn = 512 if _vmem_capacity_bytes() <= 64 * 1024 * 1024 else 1024
    tn = min(tn, _round_up(hidden, 128))
    assert tn == hidden or tn % 128 == 0, "hidden tile must be lane-aligned (x128)"

    w1 = w1.astype(compute_dtype)
    w2 = w2.astype(compute_dtype)
    w3 = w3.astype(compute_dtype)

    hidden_pad = _round_up(hidden, tn)
    if hidden_pad != hidden:
        pad = hidden_pad - hidden
        w1 = jnp.pad(w1, ((0, pad), (0, 0)))
        w3 = jnp.pad(w3, ((0, pad), (0, 0)))
        w2 = jnp.pad(w2, ((0, 0), (0, pad)))

    n_tiles = hidden_pad // tn
    w1t = w1.T.reshape(dim, n_tiles, tn)
    w3t = w3.T.reshape(dim, n_tiles, tn)
    w13 = jnp.concatenate([w1t, w3t], axis=2)          # (dim, n_tiles, 2*tn)
    w13 = jnp.transpose(w13, (1, 0, 2))                # (n_tiles, dim, 2*tn)
    w2t = w2.T                                         # (hidden_pad, dim)
    return w13, w2t, tn


def _working_set_bytes(tm, tn, dim, x_bytes, w_bytes, out_bytes):
    # Double-buffered streamed tiles + resident f32 accumulator.
    return (2 * tm * dim * x_bytes            # x row tiles
            + 2 * tm * dim * out_bytes        # output tiles
            + 2 * dim * (2 * tn) * w_bytes    # fused [w1|w3]^T slabs
            + 2 * tn * dim * w_bytes          # w2^T tiles
            + tm * dim * 4)                   # f32 accumulator


def _select_tm(m_pad, dim, tn, x_bytes, w_bytes, out_bytes):
    vmem_cap = _vmem_capacity_bytes()
    limit = vmem_cap * 3 // 4
    # v5e/v6e (128 MiB VMEM): tm=512 pushes large-M calls to MXU-bound;
    # v7x (64 MiB/TC): tm=384 keeps the tn<=512 working set under ~48 MiB.
    tm = 512 if vmem_cap > 64 * 1024 * 1024 else 384
    tm = max(8, min(_round_up(tm, 8), m_pad))
    while tm > 8 and _working_set_bytes(tm, tn, dim, x_bytes, w_bytes, out_bytes) > limit:
        tm = max(8, _round_up(tm // 2, 8))
    # v7x has 2 TensorCores: ensure the "parallel" row axis has >=2 tiles when
    # there is enough work (harmless on single-TC chips).
    if m_pad >= 512 and pl.cdiv(m_pad, tm) < 2:
        tm = _round_up(pl.cdiv(m_pad, 2), 8)
    return tm


def _ffn_kernel(x_ref, w13_ref, w2_ref, o_ref, acc_ref, *, tn):
    j = pl.program_id(1)

    x = x_ref[...]                                                    # (tm, dim)
    # Fused gate/up projection: one MXU matmul over the (dim, 2*tn) slab.
    h = jnp.dot(x, w13_ref[...], preferred_element_type=jnp.float32)  # (tm, 2*tn)
    h1 = h[:, :tn]          # lane-aligned split (tn % 128 == 0)
    h3 = h[:, tn:]
    gated = (h1 * jax.nn.sigmoid(h1)) * h3                            # f32 VPU/EUP
    partial = jnp.dot(gated.astype(w2_ref.dtype), w2_ref[...],
                      preferred_element_type=jnp.float32)             # (tm, dim)

    @pl.when(j == 0)
    def _first():
        acc_ref[...] = partial          # direct write: no zero-init + add pass

    @pl.when(j > 0)
    def _rest():
        acc_ref[...] += partial

    @pl.when(j == pl.num_programs(1) - 1)
    def _finalize():
        o_ref[...] = acc_ref[...].astype(o_ref.dtype)


@functools.partial(jax.jit, static_argnames=("tm", "vmem_limit_bytes"))
def feed_forward(x, w13, w2t, *, tm=None, vmem_limit_bytes=None):
    """x: (..., dim); w13/w2t from prepare_ffn_weights. Returns (..., dim)."""
    *lead, dim = x.shape
    n_tiles, w_dim, two_tn = w13.shape
    tn = two_tn // 2
    hidden_pad = w2t.shape[0]
    assert w_dim == dim and hidden_pad == n_tiles * tn

    compute_dtype = w13.dtype
    out_dtype = x.dtype

    m = 1
    for d in lead:
        m *= d
    x2d = x.reshape(m, dim).astype(compute_dtype)
    m_pad = _round_up(m, 8)                 # sublane alignment only; grid uses cdiv
    if m_pad != m:
        x2d = jnp.pad(x2d, ((0, m_pad - m), (0, 0)))

    x_bytes = jnp.dtype(compute_dtype).itemsize
    out_bytes = jnp.dtype(out_dtype).itemsize
    if tm is None:
        tm = _select_tm(m_pad, dim, tn, x_bytes, x_bytes, out_bytes)
    tm = max(8, min(int(tm), m_pad))
    if vmem_limit_bytes is None:
        vmem_limit_bytes = _vmem_limit_bytes()

    grid = (pl.cdiv(m_pad, tm), n_tiles)    # (row tiles, hidden tiles)

    out2d = pl.pallas_call(
        functools.partial(_ffn_kernel, tn=tn),
        out_shape=jax.ShapeDtypeStruct((m_pad, dim), out_dtype),
        grid_spec=pltpu.PrefetchScalarGridSpec(
            num_scalar_prefetch=0,
            grid=grid,
            in_specs=[
                pl.BlockSpec((tm, dim), lambda i, j: (i, 0)),                    # x rows
                pl.BlockSpec((pl.Squeezed(), dim, 2 * tn), lambda i, j: (j, 0, 0)),  # [w1|w3]^T slab
                pl.BlockSpec((tn, dim), lambda i, j: (j, 0)),                    # w2^T tile
            ],
            out_specs=pl.BlockSpec((tm, dim), lambda i, j: (i, 0)),
            scratch_shapes=[pltpu.VMEM((tm, dim), jnp.float32)],
        ),
        compiler_params=pltpu.CompilerParams(
            dimension_semantics=("parallel", "arbitrary"),
            vmem_limit_bytes=int(vmem_limit_bytes),
        ),
    )(x2d, w13, w2t)

    if m_pad != m:
        out2d = out2d[:m]
    return out2d.reshape(*lead, dim)


if __name__ == "__main__":
    # Small shapes consistent with the module.
    batch, seq, dim = 2, 8, 64
    multiple_of = 32
    hidden = llama_ffn_hidden_dim(dim, 4 * dim, multiple_of, None)   # -> 192

    key = jax.random.PRNGKey(0)
    kx, k1, k2, k3 = jax.random.split(key, 4)
    x = jax.random.normal(kx, (batch, seq, dim), dtype=jnp.float32)
    # nn.Linear weight shapes: (out_features, in_features)
    w1 = jax.random.normal(k1, (hidden, dim), dtype=jnp.float32) * 0.02
    w2 = jax.random.normal(k2, (dim, hidden), dtype=jnp.float32) * 0.02
    w3 = jax.random.normal(k3, (hidden, dim), dtype=jnp.float32) * 0.02

    # Reference (same math as the PyTorch forward), in f32.
    h1 = x @ w1.T
    ref = (h1 * jax.nn.sigmoid(h1) * (x @ w3.T)) @ w2.T

    # Exact-precision path (f32 weights): tight check. tn=128 -> hidden padded
    # to 256 / 2 hidden tiles, tm=8 -> 2 row tiles, exercising the accumulation
    # and multi-row-tile paths.
    w13_f32, w2t_f32, _ = prepare_ffn_weights(w1, w2, w3, tn=128,
                                              compute_dtype=jnp.float32)
    out_f32 = jax.block_until_ready(feed_forward(x, w13_f32, w2t_f32, tm=8))
    assert out_f32.shape == (batch, seq, dim)
    assert jnp.allclose(out_f32, ref, atol=1e-4, rtol=1e-4)

    # Production path: bf16 weights + activations (default), auto tile sizes.
    w13_bf, w2t_bf, _ = prepare_ffn_weights(w1, w2, w3, tn=128)
    out_bf = jax.block_until_ready(feed_forward(x, w13_bf, w2t_bf))
    assert out_bf.shape == (batch, seq, dim)
    assert jnp.allclose(out_bf.astype(jnp.float32), ref, atol=3e-2, rtol=3e-2)

    print("KERNEL_OK")
</pallas_src>

<mosaic_0001>
module attributes {stable_mosaic.version = 11 : i64} {
  func.func @_ffn_kernel(%arg0: i32, %arg1: i32, %arg2: memref<8x64xf32, #tpu.memory_space<vmem>>, %arg3: memref<1x64x256xf32, #tpu.memory_space<vmem>>, %arg4: memref<128x64xf32, #tpu.memory_space<vmem>>, %arg5: memref<8x64xf32, #tpu.memory_space<vmem>>, %arg6: memref<8x64xf32, #tpu.memory_space<vmem>>) attributes {dimension_semantics = [#tpu.dimension_semantics<parallel>, #tpu.dimension_semantics<arbitrary>], iteration_bounds = array<i64: 2, 2>, scalar_prefetch = 0 : i64, scratch_operands = 1 : i64, tpu.core_type = #tpu.core_type<tc>, window_params = [{transform_indices = @transform_0, window_bounds = array<i64: 8, 64>}, {transform_indices = @transform_1, window_bounds = array<i64: 1, 64, 256>}, {transform_indices = @transform_2, window_bounds = array<i64: 128, 64>}, {transform_indices = @transform_3, window_bounds = array<i64: 8, 64>}]} {
    %c0 = arith.constant 0 : index
    %c0_0 = arith.constant 0 : index
    %0 = vector.load %arg2[%c0, %c0_0] : memref<8x64xf32, #tpu.memory_space<vmem>>, vector<8x64xf32>
    %c0_1 = arith.constant 0 : index
    %c0_2 = arith.constant 0 : index
    %c0_3 = arith.constant 0 : index
    %1 = vector.load %arg3[%c0_1, %c0_2, %c0_3] : memref<1x64x256xf32, #tpu.memory_space<vmem>>, vector<1x64x256xf32>
    %2 = vector.shape_cast %1 : vector<1x64x256xf32> to vector<64x256xf32>
    %cst = arith.constant dense<0.000000e+00> : vector<8x256xf32>
    %3 = tpu.matmul %0, %2, %cst {dimension_numbers = #tpu.dot_dimension_numbers<[1], [0], [0], [1], [0, 0, 1, 1], [], []>} : vector<8x64xf32>, vector<64x256xf32>, vector<8x256xf32> -> vector<8x256xf32>
    %4 = vector.extract_strided_slice %3 {offsets = [0, 0], sizes = [8, 128], strides = [1, 1]} : vector<8x256xf32> to vector<8x128xf32>
    %5 = vector.extract_strided_slice %3 {offsets = [0, 128], sizes = [8, 128], strides = [1, 1]} : vector<8x256xf32> to vector<8x128xf32>
    %6 = arith.negf %4 : vector<8x128xf32>
    %7 = math.exp %6 : vector<8x128xf32>
    %cst_4 = arith.constant 1.000000e+00 : f32
    %8 = vector.broadcast %cst_4 : f32 to vector<8x128xf32>
    %9 = arith.addf %8, %7 : vector<8x128xf32>
    %10 = arith.divf %8, %9 : vector<8x128xf32>
    %11 = arith.mulf %4, %10 : vector<8x128xf32>
    %12 = arith.mulf %11, %5 : vector<8x128xf32>
    %c0_5 = arith.constant 0 : index
    %c0_6 = arith.constant 0 : index
    %13 = vector.load %arg4[%c0_5, %c0_6] : memref<128x64xf32, #tpu.memory_space<vmem>>, vector<128x64xf32>
    %cst_7 = arith.constant dense<0.000000e+00> : vector<8x64xf32>
    %14 = tpu.matmul %12, %13, %cst_7 {dimension_numbers = #tpu.dot_dimension_numbers<[1], [0], [0], [1], [0, 0, 1, 1], [], []>} : vector<8x128xf32>, vector<128x64xf32>, vector<8x64xf32> -> vector<8x64xf32>
    %c0_i32 = arith.constant 0 : i32
    %15 = arith.cmpi eq, %arg1, %c0_i32 : i32
    %16 = arith.extui %15 : i1 to i32
    %c0_i32_8 = arith.constant 0 : i32
    %17 = arith.cmpi ne, %16, %c0_i32_8 : i32
    scf.if %17 {
      %c0_12 = arith.constant 0 : index
      %c0_13 = arith.constant 0 : index
      %24 = vector.load %arg6[%c0_12, %c0_13] : memref<8x64xf32, #tpu.memory_space<vmem>>, vector<8x64xf32>
      tpu.vector_store %arg6[%c0_12, %c0_13], %14 {strides = array<i32>} : memref<8x64xf32, #tpu.memory_space<vmem>>, vector<8x64xf32>,
    } else {
    }
    %c0_i32_9 = arith.constant 0 : i32
    %18 = arith.cmpi sgt, %arg1, %c0_i32_9 : i32
    %19 = arith.extui %18 : i1 to i32
    %c0_i32_10 = arith.constant 0 : i32
    %20 = arith.cmpi ne, %19, %c0_i32_10 : i32
    scf.if %20 {
      %c0_12 = arith.constant 0 : index
      %c0_13 = arith.constant 0 : index
      %24 = vector.load %arg6[%c0_12, %c0_13] : memref<8x64xf32, #tpu.memory_space<vmem>>, vector<8x64xf32>
      %25 = arith.addf %24, %14 : vector<8x64xf32>
      %c0_14 = arith.constant 0 : index
      %c0_15 = arith.constant 0 : index
      %26 = vector.load %arg6[%c0_14, %c0_15] : memref<8x64xf32, #tpu.memory_space<vmem>>, vector<8x64xf32>
      tpu.vector_store %arg6[%c0_14, %c0_15], %25 {strides = array<i32>} : memref<8x64xf32, #tpu.memory_space<vmem>>, vector<8x64xf32>,
    } else {
    }
    %c1_i32 = arith.constant 1 : i32
    %21 = arith.cmpi eq, %arg1, %c1_i32 : i32
    %22 = arith.extui %21 : i1 to i32
    %c0_i32_11 = arith.constant 0 : i32
    %23 = arith.cmpi ne, %22, %c0_i32_11 : i32
    scf.if %23 {
      %c0_12 = arith.constant 0 : index
      %c0_13 = arith.constant 0 : index
      %24 = vector.load %arg6[%c0_12, %c0_13] : memref<8x64xf32, #tpu.memory_space<vmem>>, vector<8x64xf32>
      %c0_14 = arith.constant 0 : index
      %c0_15 = arith.constant 0 : index
      %25 = vector.load %arg5[%c0_14, %c0_15] : memref<8x64xf32, #tpu.memory_space<vmem>>, vector<8x64xf32>
      tpu.vector_store %arg5[%c0_14, %c0_15], %24 {strides = array<i32>} : memref<8x64xf32, #tpu.memory_space<vmem>>, vector<8x64xf32>,
    } else {
    }
    return
  }
  func.func @transform_0(%arg0: i32, %arg1: i32) -> (i32, i32) {
    %c0_i32 = arith.constant 0 : i32
    %c0_i32_0 = arith.constant 0 : i32
    return %arg0, %c0_i32 : i32, i32
  }
  func.func @transform_1(%arg0: i32, %arg1: i32) -> (i32, i32, i32) {
    %c0_i32 = arith.constant 0 : i32
    %c0_i32_0 = arith.constant 0 : i32
    %c0_i32_1 = arith.constant 0 : i32
    return %arg1, %c0_i32, %c0_i32_0 : i32, i32, i32
  }
  func.func @transform_2(%arg0: i32, %arg1: i32) -> (i32, i32) {
    %c0_i32 = arith.constant 0 : i32
    %c0_i32_0 = arith.constant 0 : i32
    return %arg1, %c0_i32 : i32, i32
  }
  func.func @transform_3(%arg0: i32, %arg1: i32) -> (i32, i32) {
    %c0_i32 = arith.constant 0 : i32
    %c0_i32_0 = arith.constant 0 : i32
    return %arg0, %c0_i32 : i32, i32
  }
}

</mosaic_0001>

<llo_original>
// kernel: feed_forward.1
$region0: #{feed_forward.1}
  #allocation0 [shape = 'u32[]', space=smem, size = 0x4, offset = 0x4, fixed_abs, tag = 'smem constant byte address 0x4 - core index']
  #allocation1 [shape = 'u32[144,128]{1,0:T(1,128)}', space=vmem, size = 0x12000, scoped, tag = 'internal scratch']
  #allocation2 [shape = 'f32[8,64]{1,0:T(8,128)}', space=vmem, size = 0x1000, scoped, tag = 'scratch operand']
  %s0 = inlined_call_operand.vmem [shape: f32[16,64], index: 0, kind: input, shape index: {}]
  %s1 = inlined_call_operand.vmem [shape: f32[2,64,256], index: 1, kind: input, shape index: {}]
  %s2 = inlined_call_operand.vmem [shape: f32[256,64], index: 2, kind: input, shape index: {}]
  %s3 = inlined_call_operand.hbm [shape: f32[16,64], index: 3, kind: output, shape index: {}]
  %s4 = sld [smem:[#allocation0]]
  $region57: #{feed_forward.1} parent=0
    _
  %s6 = ssub.s32 1, %s4
  %s7 = scalar_select 0, %s6, %s4
  $region1: #{feed_forward.1} parent=0
    #allocation3 [shape = 'u8[8192]{0}', space=vmem, size = 0x2000, scoped, tag = 'output window, operand 0']
    #allocation4 [shape = 's32[2]{0}', space=sflag, size = 0x8, scoped, tag = 'scoped memory for feed_forward.1']
    %8 = vsyncpa [#allocation4], 0
    %s9 = scalar_lea.sflag [#allocation4], 1
    %10 = vsyncpa %s9, 0
    loop: start=0, step=1, limit=6
    $region2: #{feed_forward.1} parent=1 // loop_pre_header
      _
    $region3: #{feed_forward.1} parent=1 // loop_header
      %s12 = sphi 0, %s16
      %p13 = scmp.ge.s32.totalorder %s12, 6
      %s19 = sphi 0, %s31
      %s20 = sphi 0, %s27
      %s21 = sphi 0, %s19
      %s22 = sphi 0, %s20
      %s23 = sphi 0, %s21
      %s24 = sphi 0, %s22
      %s34 = sphi 0, %s36
      %s37 = sphi 0, %s34
      %s38 = sphi 0, %s37
      %s54 = sphi 0, %s38
      %s60 = sphi 0, %s62
      %s63 = sphi 0, %s60
      %s64 = sphi 0, %s63
      %s80 = sphi 0, %s64
      %s86 = sphi 0, %s88
      %s89 = sphi 0, %s86
      %s90 = sphi 0, %s89
      %s106 = sphi 0, %s90
      %s112 = sphi 0, %s114
      %s115 = sphi 0, %s112
      %s116 = sphi 0, %s115
      %s132 = sphi 0, %s116
    $region4: #{feed_forward.1} parent=1 // loop_header_branch
      %15 = sbr.rel (%p13) target = $region8
    $region5: #{feed_forward.1} parent=1 // loop_body
      %s17 = ssub.s32 %s12, 1
      %s18 = ssub.s32 %s12, 2
      %s25 = sadd.s32 1, %s20
      %p26 = scmp.ge.s32.totalorder %s25, 2
      %s27 = scalar_select %p26, 0, %s25
      %s28 = sadd.s32 1, %s19
      %s29 = scalar_select %p26, %s28, %s19
      %p30 = scmp.ge.s32.totalorder %s29, 2
      %s31 = scalar_select %p30, 0, %s29
      %s32 = ssub.s32 %s19, %s31
      %p33 = scmp.eq.s32.totalorder %s32, 0
      %s35 = sadd.s32 %s34, 1
      %s36 = scalar_select %p33, %s34, %s35
      %p39 = pneg %p33
      %p40 = scmp.eq.s32.totalorder %s12, 3
      %p41 = por %p39, %p40
      %p42 = scmp.ne.s32.totalorder %s34, %s37
      %p43 = scmp.eq.s32.totalorder %s12, 0
      %p44 = por %p42, %p43
      %p45 = scmp.ne.s32.totalorder %s34, %s37
      %p46 = scmp.eq.s32.totalorder %s17, 3
      %p47 = por %p45, %p46
      %p48 = scmp.ne.s32.totalorder %s37, %s38
      %p49 = scmp.eq.s32.totalorder %s17, 0
      %p50 = por %p48, %p49
      %p51 = scmp.ne.s32.totalorder %s37, %s38
      %p52 = scmp.eq.s32.totalorder %s18, 3
      %p53 = por %p51, %p52
      %p55 = scmp.ne.s32.totalorder %s38, %s54
      %p56 = scmp.eq.s32.totalorder %s18, 0
      %p57 = por %p55, %p56
      %s58 = ssub.s32 %s20, %s27
      %p59 = scmp.eq.s32.totalorder %s58, 0
      %s61 = sadd.s32 %s60, 1
      %s62 = scalar_select %p59, %s60, %s61
      %p65 = pneg %p59
      %p66 = scmp.eq.s32.totalorder %s12, 3
      %p67 = por %p65, %p66
      %p68 = scmp.ne.s32.totalorder %s60, %s63
      %p69 = scmp.eq.s32.totalorder %s12, 0
      %p70 = por %p68, %p69
      %p71 = scmp.ne.s32.totalorder %s60, %s63
      %p72 = scmp.eq.s32.totalorder %s17, 3
      %p73 = por %p71, %p72
      %p74 = scmp.ne.s32.totalorder %s63, %s64
      %p75 = scmp.eq.s32.totalorder %s17, 0
      %p76 = por %p74, %p75
      %p77 = scmp.ne.s32.totalorder %s63, %s64
      %p78 = scmp.eq.s32.totalorder %s18, 3
      %p79 = por %p77, %p78
      %p81 = scmp.ne.s32.totalorder %s64, %s80
      %p82 = scmp.eq.s32.totalorder %s18, 0
      %p83 = por %p81, %p82
      %s84 = ssub.s32 %s20, %s27
      %p85 = scmp.eq.s32.totalorder %s84, 0
      %s87 = sadd.s32 %s86, 1
      %s88 = scalar_select %p85, %s86, %s87
      %p91 = pneg %p85
      %p92 = scmp.eq.s32.totalorder %s12, 3
      %p93 = por %p91, %p92
      %p94 = scmp.ne.s32.totalorder %s86, %s89
      %p95 = scmp.eq.s32.totalorder %s12, 0
      %p96 = por %p94, %p95
      %p97 = scmp.ne.s32.totalorder %s86, %s89
      %p98 = scmp.eq.s32.totalorder %s17, 3
      %p99 = por %p97, %p98
      %p100 = scmp.ne.s32.totalorder %s89, %s90
      %p101 = scmp.eq.s32.totalorder %s17, 0
      %p102 = por %p100, %p101
      %p103 = scmp.ne.s32.totalorder %s89, %s90
      %p104 = scmp.eq.s32.totalorder %s18, 3
      %p105 = por %p103, %p104
      %p107 = scmp.ne.s32.totalorder %s90, %s106
      %p108 = scmp.eq.s32.totalorder %s18, 0
      %p109 = por %p107, %p108
      %s110 = ssub.s32 %s19, %s31
      %p111 = scmp.eq.s32.totalorder %s110, 0
      %s113 = sadd.s32 %s112, 1
      %s114 = scalar_select %p111, %s112, %s113
      %p117 = pneg %p111
      %p118 = scmp.eq.s32.totalorder %s12, 3
      %p119 = por %p117, %p118
      %p120 = scmp.ne.s32.totalorder %s112, %s115
      %p121 = scmp.eq.s32.totalorder %s12, 0
      %p122 = por %p120, %p121
      %p123 = scmp.ne.s32.totalorder %s112, %s115
      %p124 = scmp.eq.s32.totalorder %s17, 3
      %p125 = por %p123, %p124
      %p126 = scmp.ne.s32.totalorder %s115, %s116
      %p127 = scmp.eq.s32.totalorder %s17, 0
      %p128 = por %p126, %p127
      %p129 = scmp.ne.s32.totalorder %s115, %s116
      %p130 = scmp.eq.s32.totalorder %s18, 3
      %p131 = por %p129, %p130
      %p133 = scmp.ne.s32.totalorder %s116, %s132
      %p134 = scmp.eq.s32.totalorder %s18, 0
      %p135 = por %p133, %p134
      %p136 = scmp.le.s32.totalorder 1, %s12
      %p137 = scmp.lt.s32.totalorder %s12, 5
      %p138 = pnand %p136, %p137
      %p139 = pneg %p138
      // Predicated region
      $region9: #{feed_forward.1} parent=5 // pred_check
        _
      $region10: #{feed_forward.1} parent=5 // pred_check_branch
        %141 = sbr.rel (%p138) target = $region12
      $region11: #{feed_forward.1} parent=5 // pred_region
        %s142 = ssub.s32 %s12, 1
      $region12: #{feed_forward.1} parent=5 // pred_fallthru
        _
      %p143 = scmp.lt.s32.totalorder %s12, 4
      // Predicated region
      $region13: #{feed_forward.1} parent=5 // pred_check
        %p144 = pneg %p143
      $region14: #{feed_forward.1} parent=5 // pred_check_branch
        %146 = sbr.rel (%p144) target = $region16
      $region15: #{feed_forward.1} parent=5 // pred_region
        // Predicated region
        $region17: #{feed_forward.1} parent=15 // pred_check
          %p147 = pneg %p44
        $region18: #{feed_forward.1} parent=15 // pred_check_branch
          %149 = sbr.rel (%p147) target = $region20
        $region19: #{feed_forward.1} parent=15 // pred_region
          %p150 = scmp.lt.s32.totalorder %s19, 1
          %s151 = scalar_select %p150, %s19, 1
          %s152 = smul.addr %s151, 8
          %s153 = scalar_lea.vmem %s0, %s152
        $region20: #{feed_forward.1} parent=15 // pred_fallthru
          _
        // Predicated region
        $region21: #{feed_forward.1} parent=15 // pred_check
          %p154 = pneg %p70
        $region22: #{feed_forward.1} parent=15 // pred_check_branch
          %156 = sbr.rel (%p154) target = $region24
        $region23: #{feed_forward.1} parent=15 // pred_region
          %p157 = scmp.lt.s32.totalorder %s20, 1
          %s158 = scalar_select %p157, %s20, 1
          %s159 = smul.addr %s158, 16
          %s160 = smul.addr %s159, 8
          %s161 = scalar_lea.vmem %s1, %s160
        $region24: #{feed_forward.1} parent=15 // pred_fallthru
          _
        // Predicated region
        $region25: #{feed_forward.1} parent=15 // pred_check
          %p162 = pneg %p96
        $region26: #{feed_forward.1} parent=15 // pred_check_branch
          %164 = sbr.rel (%p162) target = $region28
        $region27: #{feed_forward.1} parent=15 // pred_region
          %s165 = smul.u32 16, %s20
          %p166 = scmp.lt.s32.totalorder %s165, 31
          %s167 = scalar_select %p166, %s165, 31
          %s168 = smul.addr %s167, 8
          %s169 = scalar_lea.vmem %s2, %s168
          %s170 = smul.u32 16, %s20
        $region28: #{feed_forward.1} parent=15 // pred_fallthru
          _
      $region16: #{feed_forward.1} parent=5 // pred_fallthru
        _
      %p171 = scmp.le.s32.totalorder 1, %s12
      %p172 = scmp.lt.s32.totalorder %s12, 5
      %p173 = pnand %p171, %p172
      %p174 = pneg %p173
      // Predicated region
      $region29: #{feed_forward.1} parent=5 // pred_check
        _
      $region30: #{feed_forward.1} parent=5 // pred_check_branch
        %176 = sbr.rel (%p173) target = $region32
      $region31: #{feed_forward.1} parent=5 // pred_region
        %s177 = ssub.s32 %s12, 1
        %p178 = scmp.lt.s32.totalorder %s21, 1
        %s179 = scalar_select %p178, %s21, 1
        %s180 = smul.addr %s179, 8
        %s181 = scalar_lea.vmem %s0, %s180
        %p182 = pneg %p50
        %p183 = pneg %p47
        %p184 = scmp.lt.s32.totalorder %s22, 1
        %s185 = scalar_select %p184, %s22, 1
        %s186 = smul.addr %s185, 16
        %s187 = smul.addr %s186, 8
        %s188 = scalar_lea.vmem %s1, %s187
        %p189 = pneg %p76
        %p190 = pneg %p73
        %s191 = smul.u32 16, %s22
        %p192 = scmp.lt.s32.totalorder %s191, 31
        %s193 = scalar_select %p192, %s191, 31
        %s194 = smul.addr %s193, 8
        %s195 = scalar_lea.vmem %s2, %s194
        %p196 = pneg %p102
        %p197 = pneg %p99
        %p198 = pneg %p128
        %p199 = pneg %p125
        %s200 = sand.u32 %s115, 1
        %s201 = scalar_lea.sflag [#allocation4], %s200
        %s202 = sand.u32 %s115, 1
        %s203 = smul.addr %s202, 8
        %s204 = scalar_lea.vmem [#allocation3], %s203
        %p205 = scmp.lt.s32.totalorder %s21, 1
        %s206 = scalar_select %p205, %s21, 1
        %s207 = smul.addr %s206, 8
        %s208 = scalar_lea.vmem %s0, %s207
        %p209 = scmp.lt.s32.totalorder %s22, 1
        %s210 = scalar_select %p209, %s22, 1
        %s211 = smul.addr %s210, 16
        %s212 = smul.addr %s211, 8
        %s213 = scalar_lea.vmem %s1, %s212
        %s214 = smul.u32 16, %s22
        %p215 = scmp.lt.s32.totalorder %s214, 31
        %s216 = scalar_select %p215, %s214, 31
        %s217 = smul.addr %s216, 8
        %s218 = scalar_lea.vmem %s2, %s217
        %s219 = smul.u32 16, %s22
        %v220 = vld [vmem:[%s208] sm:$0xff]
        %v221 = vld [vmem:[%s213] sm:$0xff]
        %v222 = vld [vmem:[%s213 + $0x8] sm:$0xff]
        %v223 = vld [vmem:[%s213 + $0x10] sm:$0xff]
        %v224 = vld [vmem:[%s213 + $0x18] sm:$0xff]
        %v225 = vld [vmem:[%s213 + $0x20] sm:$0xff]
        %v226 = vld [vmem:[%s213 + $0x28] sm:$0xff]
        %v227 = vld [vmem:[%s213 + $0x30] sm:$0xff]
        %v228 = vld [vmem:[%s213 + $0x38] sm:$0xff]
        %v229 = vld [vmem:[%s213 + $0x40] sm:$0xff]
        %v230 = vld [vmem:[%s213 + $0x48] sm:$0xff]
        %v231 = vld [vmem:[%s213 + $0x50] sm:$0xff]
        %v232 = vld [vmem:[%s213 + $0x58] sm:$0xff]
        %v233 = vld [vmem:[%s213 + $0x60] sm:$0xff]
        %v234 = vld [vmem:[%s213 + $0x68] sm:$0xff]
        %v235 = vld [vmem:[%s213 + $0x70] sm:$0xff]
        %v236 = vld [vmem:[%s213 + $0x78] sm:$0xff]
        %vm237 = vcmask 523264
        %v239 = vsel %vm237, %v220, 0
        %241 = vmatprep.subr.mxu0 0.0
        %242 = vmatpush1.msra.mxu0 0.0
        %243 = vmatprep.subr.mxu0 0.0
        %244 = vmatpush1.msra.mxu0 0.0
        %245 = vmatprep.subr.mxu0 0.0
        %246 = vmatpush1.msra.mxu0 0.0
        %247 = vmatprep.subr.mxu0 0.0
        %248 = vmatpush1.msra.mxu0 0.0
        %249 = vmatprep.subr.mxu0 0.0
        %250 = vmatpush1.msra.mxu0 0.0
        %251 = vmatprep.subr.mxu0 0.0
        %252 = vmatpush1.msra.mxu0 0.0
        %253 = vmatprep.subr.mxu0 0.0
        %254 = vmatpush1.msra.mxu0 0.0
        %255 = vmatprep.subr.mxu0 0.0
        %256 = vmatpush1.msra.mxu0 0.0
        %257 = vmatprep.subr.mxu0 %v236
        %258 = vmatpush1.msra.mxu0 %v235
        %259 = vmatprep.subr.mxu0 %v234
        %260 = vmatpush1.msra.mxu0 %v233
        %261 = vmatprep.subr.mxu0 %v232
        %262 = vmatpush1.msra.mxu0 %v231
        %263 = vmatprep.subr.mxu0 %v230
        %264 = vmatpush1.msra.mxu0 %v229
        %265 = vmatprep.subr.mxu0 %v228
        %266 = vmatpush1.msra.mxu0 %v227
        %267 = vmatprep.subr.mxu0 %v226
        %268 = vmatpush1.msra.mxu0 %v225
        %269 = vmatprep.subr.mxu0 %v224
        %270 = vmatpush1.msra.mxu0 %v223
        %271 = vmatprep.subr.mxu0 %v222
        %272 = vmatpush1.msra.mxu0 %v221
        %273 = vmatprep.subr.mxu0 0.0
        %274 = vmatpush2.msra.mxu0 0.0
        %275 = vmatprep.subr.mxu0 0.0
        %276 = vmatpush2.msra.mxu0 0.0
        %277 = vmatprep.subr.mxu0 0.0
        %278 = vmatpush2.msra.mxu0 0.0
        %279 = vmatprep.subr.mxu0 0.0
        %280 = vmatpush2.msra.mxu0 0.0
        %281 = vmatprep.subr.mxu0 0.0
        %282 = vmatpush2.msra.mxu0 0.0
        %283 = vmatprep.subr.mxu0 0.0
        %284 = vmatpush2.msra.mxu0 0.0
        %285 = vmatprep.subr.mxu0 0.0
        %286 = vmatpush2.msra.mxu0 0.0
        %287 = vmatprep.subr.mxu0 0.0
        %288 = vmatpush2.msra.mxu0 0.0
        %289 = vmatprep.subr.mxu0 0.0
        %290 = vmatpush2.msra.mxu0 0.0
        %291 = vmatprep.subr.mxu0 0.0
        %292 = vmatpush2.msra.mxu0 0.0
        %293 = vmatprep.subr.mxu0 0.0
        %294 = vmatpush2.msra.mxu0 0.0
        %295 = vmatprep.subr.mxu0 0.0
        %296 = vmatpush2.msra.mxu0 0.0
        %297 = vmatprep.subr.mxu0 0.0
        %298 = vmatpush2.msra.mxu0 0.0
        %299 = vmatprep.subr.mxu0 0.0
        %300 = vmatpush2.msra.mxu0 0.0
        %301 = vmatprep.subr.mxu0 0.0
        %302 = vmatpush2.msra.mxu0 0.0
        %303 = vmatprep.subr.mxu0 0.0
        %304 = vmatpush2.msra.mxu0 0.0
        %305 = vmatprep.mubr.f32.mxu0 0.0
        %306 = vmatmul.mubr.f32.gmra.mxu0 %v239
        %v307 = vpop.f32.mrf.mxu0
        %v308 = vadd.f32 0.0, %v307
        %v309 = vpop.f32.mrf.mxu0
        %v310 = vadd.f32 0.0, %v309
        %311 = vdwg.mxu0
        %v312 = vxor.u32 %v308, 2147483648
        %v313 = vmul.f32 %v312, 1.442695
        %v314 = vpow.pop %v313
        %v315 = vadd.f32 %v314, 1.0
        %v316 = vrcp.pop %v315
        %v317 = vmul.f32 1.0, %v316
        %v318 = vmul.f32 %v308, %v317
        %v319 = vmul.f32 %v318, %v310
        %v320 = vld [vmem:[%s218] sm:$0xff]
        %v321 = vld [vmem:[%s218 + $0x8] sm:$0xff]
        %v322 = vld [vmem:[%s218 + $0x10] sm:$0xff]
        %v323 = vld [vmem:[%s218 + $0x18] sm:$0xff]
        %v324 = vld [vmem:[%s218 + $0x20] sm:$0xff]
        %v325 = vld [vmem:[%s218 + $0x28] sm:$0xff]
        %v326 = vld [vmem:[%s218 + $0x30] sm:$0xff]
        %v327 = vld [vmem:[%s218 + $0x38] sm:$0xff]
        %v328 = vld [vmem:[%s218 + $0x40] sm:$0xff]
        %v329 = vld [vmem:[%s218 + $0x48] sm:$0xff]
        %v330 = vld [vmem:[%s218 + $0x50] sm:$0xff]
        %v331 = vld [vmem:[%s218 + $0x58] sm:$0xff]
        %v332 = vld [vmem:[%s218 + $0x60] sm:$0xff]
        %v333 = vld [vmem:[%s218 + $0x68] sm:$0xff]
        %v334 = vld [vmem:[%s218 + $0x70] sm:$0xff]
        %v335 = vld [vmem:[%s218 + $0x78] sm:$0xff]
        %336 = vmatprep.subr.mxu0 0.0
        %337 = vmatpush1.msra.mxu0 %v335
        %338 = vmatprep.subr.mxu0 0.0
        %339 = vmatpush1.msra.mxu0 %v334
        %340 = vmatprep.subr.mxu0 0.0
        %341 = vmatpush1.msra.mxu0 %v333
        %342 = vmatprep.subr.mxu0 0.0
        %343 = vmatpush1.msra.mxu0 %v332
        %344 = vmatprep.subr.mxu0 0.0
        %345 = vmatpush1.msra.mxu0 %v331
        %346 = vmatprep.subr.mxu0 0.0
        %347 = vmatpush1.msra.mxu0 %v330
        %348 = vmatprep.subr.mxu0 0.0
        %349 = vmatpush1.msra.mxu0 %v329
        %350 = vmatprep.subr.mxu0 0.0
        %351 = vmatpush1.msra.mxu0 %v328
        %352 = vmatprep.subr.mxu0 0.0
        %353 = vmatpush1.msra.mxu0 %v327
        %354 = vmatprep.subr.mxu0 0.0
        %355 = vmatpush1.msra.mxu0 %v326
        %356 = vmatprep.subr.mxu0 0.0
        %357 = vmatpush1.msra.mxu0 %v325
        %358 = vmatprep.subr.mxu0 0.0
        %359 = vmatpush1.msra.mxu0 %v324
        %360 = vmatprep.subr.mxu0 0.0
        %361 = vmatpush1.msra.mxu0 %v323
        %362 = vmatprep.subr.mxu0 0.0
        %363 = vmatpush1.msra.mxu0 %v322
        %364 = vmatprep.subr.mxu0 0.0
        %365 = vmatpush1.msra.mxu0 %v321
        %366 = vmatprep.subr.mxu0 0.0
        %367 = vmatpush1.msra.mxu0 %v320
        %368 = vmatprep.subr.mxu0 0.0
        %369 = vmatpush2.msra.mxu0 0.0
        %370 = vmatprep.subr.mxu0 0.0
        %371 = vmatpush2.msra.mxu0 0.0
        %372 = vmatprep.subr.mxu0 0.0
        %373 = vmatpush2.msra.mxu0 0.0
        %374 = vmatprep.subr.mxu0 0.0
        %375 = vmatpush2.msra.mxu0 0.0
        %376 = vmatprep.subr.mxu0 0.0
        %377 = vmatpush2.msra.mxu0 0.0
        %378 = vmatprep.subr.mxu0 0.0
        %379 = vmatpush2.msra.mxu0 0.0
        %380 = vmatprep.subr.mxu0 0.0
        %381 = vmatpush2.msra.mxu0 0.0
        %382 = vmatprep.subr.mxu0 0.0
        %383 = vmatpush2.msra.mxu0 0.0
        %384 = vmatprep.subr.mxu0 0.0
        %385 = vmatpush2.msra.mxu0 0.0
        %386 = vmatprep.subr.mxu0 0.0
        %387 = vmatpush2.msra.mxu0 0.0
        %388 = vmatprep.subr.mxu0 0.0
        %389 = vmatpush2.msra.mxu0 0.0
        %390 = vmatprep.subr.mxu0 0.0
        %391 = vmatpush2.msra.mxu0 0.0
        %392 = vmatprep.subr.mxu0 0.0
        %393 = vmatpush2.msra.mxu0 0.0
        %394 = vmatprep.subr.mxu0 0.0
        %395 = vmatpush2.msra.mxu0 0.0
        %396 = vmatprep.subr.mxu0 0.0
        %397 = vmatpush2.msra.mxu0 0.0
        %398 = vmatprep.subr.mxu0 0.0
        %399 = vmatpush2.msra.mxu0 0.0
        %400 = vmatprep.mubr.f32.mxu0 0.0
        %401 = vmatmul.mubr.f32.gmra.mxu0 %v319
        %v402 = vpop.f32.mrf.mxu0
        %v403 = vadd.f32 0.0, %v402
        %v404 = vpop.f32.mrf.mxu0
        %405 = vdwg.mxu0
        %p406 = scmp.eq.s32.totalorder %s22, 0
        // Predicated region
        $region33: #{feed_forward.1} parent=31 // pred_check
          %p407 = pneg %p406
        $region34: #{feed_forward.1} parent=31 // pred_check_branch
          %409 = sbr.rel (%p407) target = $region36
        $region35: #{feed_forward.1} parent=31 // pred_region
          %410 = vst.msk [vmem:[#allocation2] sm:$0xff] %vm237, %v403
        $region36: #{feed_forward.1} parent=31 // pred_fallthru
          _
        %p411 = scmp.gt.s32.totalorder %s22, 0
        // Predicated region
        $region37: #{feed_forward.1} parent=31 // pred_check
          %p412 = pneg %p411
        $region38: #{feed_forward.1} parent=31 // pred_check_branch
          %414 = sbr.rel (%p412) target = $region40
        $region39: #{feed_forward.1} parent=31 // pred_region
          %v415 = vld [vmem:[#allocation2] sm:$0xff]
          %v416 = vadd.f32 %v415, %v403
          %417 = vst.msk [vmem:[#allocation2] sm:$0xff] %vm237, %v416
        $region40: #{feed_forward.1} parent=31 // pred_fallthru
          _
        %p418 = scmp.eq.s32.totalorder %s22, 1
        // Predicated region
        $region41: #{feed_forward.1} parent=31 // pred_check
          %p419 = pneg %p418
        $region42: #{feed_forward.1} parent=31 // pred_check_branch
          %421 = sbr.rel (%p419) target = $region44
        $region43: #{feed_forward.1} parent=31 // pred_region
          %v422 = vld [vmem:[#allocation2] sm:$0xff]
          %423 = vst.msk [vmem:[%s204] sm:$0xff] %vm237, %v422
        $region44: #{feed_forward.1} parent=31 // pred_fallthru
          _
        %s424 = sand.u32 %s115, 1
        %s425 = scalar_lea.sflag [#allocation4], %s424
        %s426 = sand.u32 %s115, 1
        %s427 = smul.addr %s426, 8
        %s428 = scalar_lea.vmem [#allocation3], %s427
        // Predicated region
        $region45: #{feed_forward.1} parent=31 // pred_check
          %p429 = pneg %p125
        $region46: #{feed_forward.1} parent=31 // pred_check_branch
          %431 = sbr.rel (%p429) target = $region48
        $region47: #{feed_forward.1} parent=31 // pred_region
          %s433 = ssub.s32 128, 128
          %434 = vsyncadd %s425, %s433
          %s435 = smul.addr %s21, 128
          %s436 = scalar_lea.hbm %s3, %s435
          %s438 = sshll.u32 %s428, 4
          %s439 = int_to_ptr.vmem [resolvable:$true] %s438
          %441 = dma.vmem_to_hbm [thread:$0]  %s439, 128, %s436, %s425
        $region48: #{feed_forward.1} parent=31 // pred_fallthru
          _
      $region32: #{feed_forward.1} parent=5 // pred_fallthru
        _
      %p442 = scmp.le.s32.totalorder 2, %s12
      // Predicated region
      $region49: #{feed_forward.1} parent=5 // pred_check
        %p443 = pneg %p442
      $region50: #{feed_forward.1} parent=5 // pred_check_branch
        %445 = sbr.rel (%p443) target = $region52
      $region51: #{feed_forward.1} parent=5 // pred_region
        %s446 = ssub.s32 %s12, 2
        // Predicated region
        $region53: #{feed_forward.1} parent=51 // pred_check
          %p447 = pneg %p131
        $region54: #{feed_forward.1} parent=51 // pred_check_branch
          %449 = sbr.rel (%p447) target = $region56
        $region55: #{feed_forward.1} parent=51 // pred_region
          %s450 = sand.u32 %s116, 1
          %s451 = scalar_lea.sflag [#allocation4], %s450
          %s452 = sand.u32 %s116, 1
          %s453 = smul.addr %s452, 8
          %s454 = scalar_lea.vmem [#allocation3], %s453
          %455 = dma.done %s451, 128
        $region56: #{feed_forward.1} parent=51 // pred_fallthru
          _
      $region52: #{feed_forward.1} parent=5 // pred_fallthru
        _
    $region6: #{feed_forward.1} parent=1 // loop_footer
      %s16 = sadd.s32 1, %s12
    $region7: #{feed_forward.1} parent=1 // loop_footer_branch
      %11 = sbr.rel target = $region3
    $region8: #{feed_forward.1} parent=1 // loop_exit
      _
    %456 = vsyncpa [#allocation4], 1
    %s457 = scalar_lea.sflag [#allocation4], 1
    %458 = vsyncpa %s457, 1

</llo_original>
